<compile_context>
chip_gen: v6e
topology: v6e:2x2x1
jax: 0.10.0
libtpu: 0.0.40
codegen_flags: <defaults>
</compile_context>

<pallas_src>
import jax
import jax.numpy as jnp
from jax.experimental import pallas as pl
from jax.experimental.pallas import tpu as pltpu

_TB_MAX = 1024  # batch-tile rows per grid step (multiple of 8 sublanes, ~85% HBM roofline)


def _make_mlp_kernel(n_chunks, limit_y, y_max):
    """Fused MLP kernel for `n_chunks` hstack input chunks.

    Ref order: x_0..x_{n-1}, w1_0..w1_{n-1}, b1, w2, b2, w3, b3, out
    (normalization already folded into w1/b1; weights are [in, out], biases [1, out]).
    """

    def kernel(*refs):
        x_refs = refs[:n_chunks]
        w1_refs = refs[n_chunks:2 * n_chunks]
        b1_ref, w2_ref, b2_ref, w3_ref, b3_ref, o_ref = refs[2 * n_chunks:]

        # Layer 1 (+ folded normalization) + ReLU:  h1 = relu(sum_i x_i @ W1_i + b1')
        acc = None
        for x_ref, w_ref in zip(x_refs, w1_refs):
            p = jnp.dot(x_ref[...], w_ref[...], preferred_element_type=jnp.float32)
            acc = p if acc is None else acc + p
        h1 = jnp.maximum(acc + b1_ref[...], 0.0)

        # Layer 2 + ReLU
        h2 = jnp.dot(h1, w2_ref[...], preferred_element_type=jnp.float32) + b2_ref[...]
        h2 = jnp.maximum(h2, 0.0)

        # Layer 3 (no activation)
        y = jnp.dot(h2, w3_ref[...], preferred_element_type=jnp.float32) + b3_ref[...]

        if limit_y:
            y = y_max * jnp.tanh(y)  # EUP tanh; free slot next to the MXU work

        o_ref[...] = y.astype(o_ref.dtype)

    return kernel


class ThreeLayerMLPPallas:
    """JAX/Pallas re-implementation of ThreeLayerMLP's forward pass."""

    def __init__(self, xDim, xMean, xStd, yDim, modelDimList, OptionDict=None, key=None):
        OptionDict = OptionDict or {}
        self.xDim = xDim
        self.yDim = yDim
        self.limit_y = 'yMax' in OptionDict
        self.y_max = float(OptionDict.get('yMax', 1.0))

        self.xmean = jnp.asarray(xMean, jnp.float32).reshape(1, xDim)
        self.xstd = jnp.asarray(xStd, jnp.float32).reshape(1, xDim)

        if key is None:
            key = jax.random.PRNGKey(0)
        k = jax.random.split(key, 6)
        self.h1, self.h2 = modelDimList[0], modelDimList[1]

        def linear_init(kw, kb, fan_in, fan_out):
            # nn.Linear default init: U(-1/sqrt(fan_in), 1/sqrt(fan_in))
            bound = 1.0 / jnp.sqrt(jnp.float32(fan_in))
            w = jax.random.uniform(kw, (fan_out, fan_in), jnp.float32, -bound, bound)
            b = jax.random.uniform(kb, (fan_out,), jnp.float32, -bound, bound)
            return w, b

        # Original-layout params (kept for the pure-JAX reference).
        self.w1, self.b1 = linear_init(k[0], k[1], xDim, self.h1)
        self.w2, self.b2 = linear_init(k[2], k[3], self.h1, self.h2)
        self.w3, self.b3 = linear_init(k[4], k[5], self.h2, yDim)

        # ---- one-time kernel-friendly prep (no per-call transposes / reshapes) ----
        # Weights pre-transposed to [in, out]; biases as [1, out] rows.
        w1t = self.w1.T                                   # [xDim, h1]
        inv_std = 1.0 / self.xstd                         # [1, xDim]
        # Fold (x - mean) * inv_std into layer 1:
        #   x_n @ W1t + b1 == x @ (inv_std.T * W1t) + (b1 - (mean*inv_std) @ W1t)
        self.w1t_f = inv_std.reshape(xDim, 1) * w1t       # [xDim, h1]
        self.b1_f = (self.b1.reshape(1, -1)
                     - (self.xmean * inv_std) @ w1t)      # [1, h1]
        self.w2t = self.w2.T                              # [h1, h2]
        self.b2_row = self.b2.reshape(1, -1)              # [1, h2]
        self.w3t = self.w3.T                              # [h2, yDim]
        self.b3_row = self.b3.reshape(1, -1)              # [1, yDim]

        # Cache of built pallas_call closures keyed by (batch, chunk_dims).
        self._call_cache = {}

        # TODO(synk): optional bf16 matmul inputs (v6e/v7x MXU rate + halved HBM traffic for x)
        # left out to keep bit-accuracy against the f32 torch semantics; these dims are so small
        # the workload is HBM-bound on the activations, not MXU-bound.

    # ------------------------------------------------------------------ #
    def _build_call(self, batch, chunk_dims):
        """Build (and cache) the pallas_call callable + static W1 chunk slices."""
        key = (batch, chunk_dims)
        cached = self._call_cache.get(key)
        if cached is not None:
            return cached

        n_chunks = len(chunk_dims)

        # Per-chunk slices of the folded layer-1 weight (done once per signature).
        w1_chunks = []
        off = 0
        for c in chunk_dims:
            w1_chunks.append(self.w1t_f[off:off + c, :])
            off += c

        # Batch tile: full batch if small, else 1024-row tiles (multiple of 8 sublanes).
        tb = batch if batch <= _TB_MAX else _TB_MAX
        grid = (pl.cdiv(batch, tb),)

        kernel = _make_mlp_kernel(n_chunks, self.limit_y, self.y_max)

        # BlockSpecs: x / out tiled over batch; params resident (index_map -> (0, 0)).
        x_specs = [pl.BlockSpec((tb, c), lambda i: (i, 0)) for c in chunk_dims]
        w1_specs = [pl.BlockSpec((c, self.h1), lambda i: (0, 0)) for c in chunk_dims]
        param_specs = [
            pl.BlockSpec((1, self.h1), lambda i: (0, 0)),            # b1'
            pl.BlockSpec((self.h1, self.h2), lambda i: (0, 0)),      # w2t
            pl.BlockSpec((1, self.h2), lambda i: (0, 0)),            # b2
            pl.BlockSpec((self.h2, self.yDim), lambda i: (0, 0)),    # w3t
            pl.BlockSpec((1, self.yDim), lambda i: (0, 0)),          # b3
        ]
        out_spec = pl.BlockSpec((tb, self.yDim), lambda i: (i, 0))

        flops = 2 * batch * (self.xDim * self.h1 + self.h1 * self.h2 + self.h2 * self.yDim)
        bytes_accessed = 4 * (batch * (self.xDim + self.yDim)
                              + self.xDim * self.h1 + self.h1 * self.h2 + self.h2 * self.yDim
                              + self.h1 + self.h2 + self.yDim)
        transcendentals = batch * self.yDim if self.limit_y else 0

        call = pl.pallas_call(
            kernel,
            out_shape=jax.ShapeDtypeStruct((batch, self.yDim), jnp.float32),
            grid=grid,
            in_specs=x_specs + w1_specs + param_specs,
            out_specs=out_spec,
            compiler_params=pltpu.CompilerParams(
                dimension_semantics=("parallel",),
            ),
            cost_estimate=pl.CostEstimate(
                flops=flops,
                transcendentals=transcendentals,
                bytes_accessed=bytes_accessed,
            ),
        )

        cached = (call, tuple(w1_chunks))
        self._call_cache[key] = cached
        return cached

    # ------------------------------------------------------------------ #
    def __call__(self, *xs):
        xs = [jnp.asarray(v, jnp.float32) for v in xs]
        batch = int(xs[0].shape[0])
        chunk_dims = tuple(int(v.shape[1]) for v in xs)
        assert sum(chunk_dims) == self.xDim

        call, w1_chunks = self._build_call(batch, chunk_dims)
        return call(*xs, *w1_chunks,
                    self.b1_f, self.w2t, self.b2_row, self.w3t, self.b3_row)

    # Pure-JAX reference (original, un-folded formulation) for verification.
    def reference(self, *xs):
        x = jnp.concatenate([jnp.asarray(v, jnp.float32) for v in xs], axis=-1)
        x = (x - self.xmean) / self.xstd
        x = jnp.maximum(x @ self.w1.T + self.b1, 0.0)
        x = jnp.maximum(x @ self.w2.T + self.b2, 0.0)
        x = x @ self.w3.T + self.b3
        if self.limit_y:
            x = self.y_max * jnp.tanh(x)
        return x


if __name__ == "__main__":
    key = jax.random.PRNGKey(0)
    k_in1, k_in2, k_mean, k_std, k_params = jax.random.split(key, 5)

    batch = 8
    xDim = 16          # total input features after hstack
    yDim = 8
    modelDimList = [32, 32]

    # Two input chunks that hstack into xDim features (mimics forward(*x)).
    x1 = jax.random.normal(k_in1, (batch, 10), jnp.float32)
    x2 = jax.random.normal(k_in2, (batch, 6), jnp.float32)

    xMean = jax.random.normal(k_mean, (xDim,), jnp.float32) * 0.1
    xStd = jax.random.uniform(k_std, (xDim,), jnp.float32, 0.5, 1.5)

    model = ThreeLayerMLPPallas(
        xDim, xMean, xStd, yDim, modelDimList,
        OptionDict={'yMax': 2.5},
        key=k_params,
    )

    out = model(x1, x2)
    out = jax.block_until_ready(out)

    ref = model.reference(x1, x2)
    assert out.shape == (batch, yDim)
    # Folding the normalization into W1/b1 changes rounding slightly vs the
    # reference's explicit (x - mean)/std, so use a slightly relaxed tolerance.
    assert jnp.allclose(out, ref, atol=1e-4, rtol=1e-4), "mismatch vs pure-JAX reference"

    # Second call exercises the cached pallas_call path (no re-trace).
    out2 = jax.block_until_ready(model(x1, x2))
    assert jnp.allclose(out2, out)

    print("KERNEL_OK")
</pallas_src>

<mosaic_0001>
module attributes {stable_mosaic.version = 11 : i64} {
  func.func @kernel(%arg0: i32, %arg1: memref<8x10xf32, #tpu.memory_space<vmem>>, %arg2: memref<8x6xf32, #tpu.memory_space<vmem>>, %arg3: memref<10x32xf32, #tpu.memory_space<vmem>>, %arg4: memref<6x32xf32, #tpu.memory_space<vmem>>, %arg5: memref<1x32xf32, #tpu.memory_space<vmem>>, %arg6: memref<32x32xf32, #tpu.memory_space<vmem>>, %arg7: memref<1x32xf32, #tpu.memory_space<vmem>>, %arg8: memref<32x8xf32, #tpu.memory_space<vmem>>, %arg9: memref<1x8xf32, #tpu.memory_space<vmem>>, %arg10: memref<8x8xf32, #tpu.memory_space<vmem>>) attributes {dimension_semantics = [#tpu.dimension_semantics<parallel>], iteration_bounds = array<i64: 1>, scalar_prefetch = 0 : i64, scratch_operands = 0 : i64, tpu.core_type = #tpu.core_type<tc>, window_params = [{transform_indices = @transform_0, window_bounds = array<i64: 8, 10>}, {transform_indices = @transform_1, window_bounds = array<i64: 8, 6>}, {pipeline_mode = #tpu.pipeline_mode<synchronous>, transform_indices = @transform_2, window_bounds = array<i64: 10, 32>}, {pipeline_mode = #tpu.pipeline_mode<synchronous>, transform_indices = @transform_3, window_bounds = array<i64: 6, 32>}, {pipeline_mode = #tpu.pipeline_mode<synchronous>, transform_indices = @transform_4, window_bounds = array<i64: 1, 32>}, {pipeline_mode = #tpu.pipeline_mode<synchronous>, transform_indices = @transform_5, window_bounds = array<i64: 32, 32>}, {pipeline_mode = #tpu.pipeline_mode<synchronous>, transform_indices = @transform_6, window_bounds = array<i64: 1, 32>}, {pipeline_mode = #tpu.pipeline_mode<synchronous>, transform_indices = @transform_7, window_bounds = array<i64: 32, 8>}, {pipeline_mode = #tpu.pipeline_mode<synchronous>, transform_indices = @transform_8, window_bounds = array<i64: 1, 8>}, {transform_indices = @transform_9, window_bounds = array<i64: 8, 8>}]} {
    %c0 = arith.constant 0 : index
    %c0_0 = arith.constant 0 : index
    %0 = vector.load %arg1[%c0, %c0_0] : memref<8x10xf32, #tpu.memory_space<vmem>>, vector<8x10xf32>
    %c0_1 = arith.constant 0 : index
    %c0_2 = arith.constant 0 : index
    %1 = vector.load %arg3[%c0_1, %c0_2] : memref<10x32xf32, #tpu.memory_space<vmem>>, vector<10x32xf32>
    %cst = arith.constant dense<0.000000e+00> : vector<8x32xf32>
    %2 = tpu.matmul %0, %1, %cst {dimension_numbers = #tpu.dot_dimension_numbers<[1], [0], [0], [1], [0, 0, 1, 1], [], []>} : vector<8x10xf32>, vector<10x32xf32>, vector<8x32xf32> -> vector<8x32xf32>
    %c0_3 = arith.constant 0 : index
    %c0_4 = arith.constant 0 : index
    %3 = vector.load %arg2[%c0_3, %c0_4] : memref<8x6xf32, #tpu.memory_space<vmem>>, vector<8x6xf32>
    %c0_5 = arith.constant 0 : index
    %c0_6 = arith.constant 0 : index
    %4 = vector.load %arg4[%c0_5, %c0_6] : memref<6x32xf32, #tpu.memory_space<vmem>>, vector<6x32xf32>
    %cst_7 = arith.constant dense<0.000000e+00> : vector<8x32xf32>
    %5 = tpu.matmul %3, %4, %cst_7 {dimension_numbers = #tpu.dot_dimension_numbers<[1], [0], [0], [1], [0, 0, 1, 1], [], []>} : vector<8x6xf32>, vector<6x32xf32>, vector<8x32xf32> -> vector<8x32xf32>
    %6 = arith.addf %2, %5 : vector<8x32xf32>
    %c0_8 = arith.constant 0 : index
    %c0_9 = arith.constant 0 : index
    %7 = vector.load %arg5[%c0_8, %c0_9] : memref<1x32xf32, #tpu.memory_space<vmem>>, vector<1x32xf32>
    %8 = vector.broadcast %7 : vector<1x32xf32> to vector<8x32xf32>
    %9 = arith.addf %6, %8 : vector<8x32xf32>
    %cst_10 = arith.constant 0.000000e+00 : f32
    %10 = vector.broadcast %cst_10 : f32 to vector<8x32xf32>
    %11 = arith.maximumf %9, %10 : vector<8x32xf32>
    %c0_11 = arith.constant 0 : index
    %c0_12 = arith.constant 0 : index
    %12 = vector.load %arg6[%c0_11, %c0_12] : memref<32x32xf32, #tpu.memory_space<vmem>>, vector<32x32xf32>
    %cst_13 = arith.constant dense<0.000000e+00> : vector<8x32xf32>
    %13 = tpu.matmul %11, %12, %cst_13 {dimension_numbers = #tpu.dot_dimension_numbers<[1], [0], [0], [1], [0, 0, 1, 1], [], []>} : vector<8x32xf32>, vector<32x32xf32>, vector<8x32xf32> -> vector<8x32xf32>
    %c0_14 = arith.constant 0 : index
    %c0_15 = arith.constant 0 : index
    %14 = vector.load %arg7[%c0_14, %c0_15] : memref<1x32xf32, #tpu.memory_space<vmem>>, vector<1x32xf32>
    %15 = vector.broadcast %14 : vector<1x32xf32> to vector<8x32xf32>
    %16 = arith.addf %13, %15 : vector<8x32xf32>
    %cst_16 = arith.constant 0.000000e+00 : f32
    %17 = vector.broadcast %cst_16 : f32 to vector<8x32xf32>
    %18 = arith.maximumf %16, %17 : vector<8x32xf32>
    %c0_17 = arith.constant 0 : index
    %c0_18 = arith.constant 0 : index
    %19 = vector.load %arg8[%c0_17, %c0_18] : memref<32x8xf32, #tpu.memory_space<vmem>>, vector<32x8xf32>
    %cst_19 = arith.constant dense<0.000000e+00> : vector<8x8xf32>
    %20 = tpu.matmul %18, %19, %cst_19 {dimension_numbers = #tpu.dot_dimension_numbers<[1], [0], [0], [1], [0, 0, 1, 1], [], []>} : vector<8x32xf32>, vector<32x8xf32>, vector<8x8xf32> -> vector<8x8xf32>
    %c0_20 = arith.constant 0 : index
    %c0_21 = arith.constant 0 : index
    %21 = vector.load %arg9[%c0_20, %c0_21] : memref<1x8xf32, #tpu.memory_space<vmem>>, vector<1x8xf32>
    %22 = vector.broadcast %21 : vector<1x8xf32> to vector<8x8xf32>
    %23 = arith.addf %20, %22 : vector<8x8xf32>
    %24 = math.tanh %23 : vector<8x8xf32>
    %cst_22 = arith.constant 2.500000e+00 : f32
    %25 = vector.broadcast %cst_22 : f32 to vector<8x8xf32>
    %26 = arith.mulf %25, %24 : vector<8x8xf32>
    %c0_23 = arith.constant 0 : index
    %c0_24 = arith.constant 0 : index
    %27 = vector.load %arg10[%c0_23, %c0_24] : memref<8x8xf32, #tpu.memory_space<vmem>>, vector<8x8xf32>
    tpu.vector_store %arg10[%c0_23, %c0_24], %26 {strides = array<i32>} : memref<8x8xf32, #tpu.memory_space<vmem>>, vector<8x8xf32>,
    return
  }
  func.func @transform_0(%arg0: i32) -> (i32, i32) {
    %c0_i32 = arith.constant 0 : i32
    %c0_i32_0 = arith.constant 0 : i32
    return %arg0, %c0_i32 : i32, i32
  }
  func.func @transform_1(%arg0: i32) -> (i32, i32) {
    %c0_i32 = arith.constant 0 : i32
    %c0_i32_0 = arith.constant 0 : i32
    return %arg0, %c0_i32 : i32, i32
  }
  func.func @transform_2(%arg0: i32) -> (i32, i32) {
    %c0_i32 = arith.constant 0 : i32
    %c0_i32_0 = arith.constant 0 : i32
    %c0_i32_1 = arith.constant 0 : i32
    return %c0_i32, %c0_i32_0 : i32, i32
  }
  func.func @transform_3(%arg0: i32) -> (i32, i32) {
    %c0_i32 = arith.constant 0 : i32
    %c0_i32_0 = arith.constant 0 : i32
    %c0_i32_1 = arith.constant 0 : i32
    return %c0_i32, %c0_i32_0 : i32, i32
  }
  func.func @transform_4(%arg0: i32) -> (i32, i32) {
    %c0_i32 = arith.constant 0 : i32
    %c0_i32_0 = arith.constant 0 : i32
    %c0_i32_1 = arith.constant 0 : i32
    return %c0_i32, %c0_i32_0 : i32, i32
  }
  func.func @transform_5(%arg0: i32) -> (i32, i32) {
    %c0_i32 = arith.constant 0 : i32
    %c0_i32_0 = arith.constant 0 : i32
    %c0_i32_1 = arith.constant 0 : i32
    return %c0_i32, %c0_i32_0 : i32, i32
  }
  func.func @transform_6(%arg0: i32) -> (i32, i32) {
    %c0_i32 = arith.constant 0 : i32
    %c0_i32_0 = arith.constant 0 : i32
    %c0_i32_1 = arith.constant 0 : i32
    return %c0_i32, %c0_i32_0 : i32, i32
  }
  func.func @transform_7(%arg0: i32) -> (i32, i32) {
    %c0_i32 = arith.constant 0 : i32
    %c0_i32_0 = arith.constant 0 : i32
    %c0_i32_1 = arith.constant 0 : i32
    return %c0_i32, %c0_i32_0 : i32, i32
  }
  func.func @transform_8(%arg0: i32) -> (i32, i32) {
    %c0_i32 = arith.constant 0 : i32
    %c0_i32_0 = arith.constant 0 : i32
    %c0_i32_1 = arith.constant 0 : i32
    return %c0_i32, %c0_i32_0 : i32, i32
  }
  func.func @transform_9(%arg0: i32) -> (i32, i32) {
    %c0_i32 = arith.constant 0 : i32
    %c0_i32_0 = arith.constant 0 : i32
    return %arg0, %c0_i32 : i32, i32
  }
}

</mosaic_0001>

<llo_original>
// kernel: tpu_custom_call.1
$region0: #{tpu_custom_call.1}
  #allocation0 [shape = 'u32[]', space=smem, size = 0x4, offset = 0x4, fixed_abs, tag = 'smem constant byte address 0x4 - core index']
  #allocation1 [shape = 'u32[144,128]{1,0:T(1,128)}', space=vmem, size = 0x12000, scoped, tag = 'internal scratch']
  %s0 = inlined_call_operand.hbm [shape: f32[8,10], index: 0, kind: input, shape index: {}]
  %s1 = inlined_call_operand.hbm [shape: f32[8,6], index: 1, kind: input, shape index: {}]
  %s2 = inlined_call_operand.vmem [shape: f32[10,32], index: 2, kind: input, shape index: {}]
  %s3 = inlined_call_operand.hbm [shape: f32[6,32], index: 3, kind: input, shape index: {}]
  %s4 = inlined_call_operand.vmem [shape: f32[1,32], index: 4, kind: input, shape index: {}]
  %s5 = inlined_call_operand.vmem [shape: f32[32,32], index: 5, kind: input, shape index: {}]
  %s6 = inlined_call_operand.vmem [shape: f32[1,32], index: 6, kind: input, shape index: {}]
  %s7 = inlined_call_operand.vmem [shape: f32[32,8], index: 7, kind: input, shape index: {}]
  %s8 = inlined_call_operand.vmem [shape: f32[1,8], index: 8, kind: input, shape index: {}]
  %s9 = inlined_call_operand.hbm [shape: f32[8,8], index: 9, kind: output, shape index: {}]
  %s10 = sld [smem:[#allocation0]]
  $region58: #{tpu_custom_call.1} parent=0
    _
  %s12 = ssub.s32 1, %s10
  %s13 = scalar_select 0, %s12, %s10
  $region1: #{tpu_custom_call.1} parent=0
    #allocation2 [shape = 'u8[4096]{0}', space=vmem, size = 0x1000, scoped, tag = 'input window, operand 0, single buffered']
    #allocation3 [shape = 's32[1]{0}', space=sflag, size = 0x4, scoped, tag = 'scoped memory for tpu_custom_call.1']
    #allocation4 [shape = 's32[1]{0}', space=sflag, size = 0x4, scoped, tag = 'scoped memory for tpu_custom_call.1']
    #allocation5 [shape = 'u8[4096]{0}', space=vmem, size = 0x1000, scoped, tag = 'input window, operand 1, single buffered']
    #allocation6 [shape = 's32[1]{0}', space=sflag, size = 0x4, scoped, tag = 'scoped memory for tpu_custom_call.1']
    #allocation7 [shape = 'u8[4096]{0}', space=vmem, size = 0x1000, scoped, tag = 'input window, operand 3, single buffered']
    #allocation8 [shape = 'u8[4096]{0}', space=vmem, size = 0x1000, scoped, tag = 'output window, operand 0, single buffered']
    %14 = vsyncpa [#allocation3], 0
    %15 = vsyncpa [#allocation6], 0
    %16 = vsyncpa [#allocation4], 0
    // Predicated region
    $region2: #{tpu_custom_call.1} parent=1 // pred_check
      _
    $region3: #{tpu_custom_call.1} parent=1 // pred_check_branch
      %18 = sbr.rel (0) target = $region5
    $region4: #{tpu_custom_call.1} parent=1 // pred_region
      %s20 = ssub.s32 128, 128
      %21 = vsyncadd [#allocation3], %s20
      %s23 = sshll.u32 [#allocation2], 4
      %s24 = int_to_ptr.vmem [resolvable:$true] %s23
      %26 = dma.hbm_to_vmem [thread:$0]  %s0, 128, %s24, [#allocation3]
    $region5: #{tpu_custom_call.1} parent=1 // pred_fallthru
      _
    // Predicated region
    $region6: #{tpu_custom_call.1} parent=1 // pred_check
      _
    $region7: #{tpu_custom_call.1} parent=1 // pred_check_branch
      %28 = sbr.rel (0) target = $region9
    $region8: #{tpu_custom_call.1} parent=1 // pred_region
      %s30 = ssub.s32 128, 128
      %31 = vsyncadd [#allocation6], %s30
      %s33 = sshll.u32 [#allocation5], 4
      %s34 = int_to_ptr.vmem [resolvable:$true] %s33
      %36 = dma.hbm_to_vmem [thread:$0]  %s1, 128, %s34, [#allocation6]
    $region9: #{tpu_custom_call.1} parent=1 // pred_fallthru
      _
    // Predicated region
    $region10: #{tpu_custom_call.1} parent=1 // pred_check
      _
    $region11: #{tpu_custom_call.1} parent=1 // pred_check_branch
      %38 = sbr.rel (0) target = $region13
    $region12: #{tpu_custom_call.1} parent=1 // pred_region
      _
    $region13: #{tpu_custom_call.1} parent=1 // pred_fallthru
      _
    // Predicated region
    $region14: #{tpu_custom_call.1} parent=1 // pred_check
      _
    $region15: #{tpu_custom_call.1} parent=1 // pred_check_branch
      %40 = sbr.rel (0) target = $region17
    $region16: #{tpu_custom_call.1} parent=1 // pred_region
      %s42 = ssub.s32 128, 128
      %43 = vsyncadd [#allocation6], %s42
      %s45 = sshll.u32 [#allocation7], 4
      %s46 = int_to_ptr.vmem [resolvable:$true] %s45
      %48 = dma.hbm_to_vmem [thread:$0]  %s3, 128, %s46, [#allocation6]
    $region17: #{tpu_custom_call.1} parent=1 // pred_fallthru
      _
    // Predicated region
    $region18: #{tpu_custom_call.1} parent=1 // pred_check
      _
    $region19: #{tpu_custom_call.1} parent=1 // pred_check_branch
      %50 = sbr.rel (0) target = $region21
    $region20: #{tpu_custom_call.1} parent=1 // pred_region
      _
    $region21: #{tpu_custom_call.1} parent=1 // pred_fallthru
      _
    // Predicated region
    $region22: #{tpu_custom_call.1} parent=1 // pred_check
      _
    $region23: #{tpu_custom_call.1} parent=1 // pred_check_branch
      %52 = sbr.rel (0) target = $region25
    $region24: #{tpu_custom_call.1} parent=1 // pred_region
      _
    $region25: #{tpu_custom_call.1} parent=1 // pred_fallthru
      _
    // Predicated region
    $region26: #{tpu_custom_call.1} parent=1 // pred_check
      _
    $region27: #{tpu_custom_call.1} parent=1 // pred_check_branch
      %54 = sbr.rel (0) target = $region29
    $region28: #{tpu_custom_call.1} parent=1 // pred_region
      _
    $region29: #{tpu_custom_call.1} parent=1 // pred_fallthru
      _
    // Predicated region
    $region30: #{tpu_custom_call.1} parent=1 // pred_check
      _
    $region31: #{tpu_custom_call.1} parent=1 // pred_check_branch
      %56 = sbr.rel (0) target = $region33
    $region32: #{tpu_custom_call.1} parent=1 // pred_region
      _
    $region33: #{tpu_custom_call.1} parent=1 // pred_fallthru
      _
    // Predicated region
    $region34: #{tpu_custom_call.1} parent=1 // pred_check
      _
    $region35: #{tpu_custom_call.1} parent=1 // pred_check_branch
      %58 = sbr.rel (0) target = $region37
    $region36: #{tpu_custom_call.1} parent=1 // pred_region
      _
    $region37: #{tpu_custom_call.1} parent=1 // pred_fallthru
      _
    // Predicated region
    $region38: #{tpu_custom_call.1} parent=1 // pred_check
      _
    $region39: #{tpu_custom_call.1} parent=1 // pred_check_branch
      %60 = sbr.rel (0) target = $region41
    $region40: #{tpu_custom_call.1} parent=1 // pred_region
      %61 = dma.done [#allocation3], 128
    $region41: #{tpu_custom_call.1} parent=1 // pred_fallthru
      _
    // Predicated region
    $region42: #{tpu_custom_call.1} parent=1 // pred_check
      _
    $region43: #{tpu_custom_call.1} parent=1 // pred_check_branch
      %63 = sbr.rel (0) target = $region45
    $region44: #{tpu_custom_call.1} parent=1 // pred_region
      %64 = dma.done [#allocation6], 128
    $region45: #{tpu_custom_call.1} parent=1 // pred_fallthru
      _
    // Predicated region
    $region46: #{tpu_custom_call.1} parent=1 // pred_check
      _
    $region47: #{tpu_custom_call.1} parent=1 // pred_check_branch
      %66 = sbr.rel (0) target = $region49
    $region48: #{tpu_custom_call.1} parent=1 // pred_region
      %67 = dma.done [#allocation6], 128
    $region49: #{tpu_custom_call.1} parent=1 // pred_fallthru
      _
    %v68 = vld [vmem:[#allocation2] sm:$0xff]
    %v69 = vld [vmem:[%s2] sm:$0xff]
    %v70 = vld [vmem:[%s2 + $0x8] sm:$0x3]
    %v71 = vld [vmem:[#allocation5] sm:$0xff]
    %v72 = vld [vmem:[#allocation7] sm:$0x3f]
    %vm73 = vcmask 48128
    %v75 = vsel %vm73, %v71, 0
    %vm77 = vcmask 1045504
    %v79 = vsel %vm77, %v72, 0
    %81 = vmatprep.subr.mxu0 0.0
    %82 = vmatpush1.msra.mxu0 0.0
    %83 = vmatprep.subr.mxu0 0.0
    %84 = vmatpush1.msra.mxu0 0.0
    %85 = vmatprep.subr.mxu0 0.0
    %86 = vmatpush1.msra.mxu0 0.0
    %87 = vmatprep.subr.mxu0 0.0
    %88 = vmatpush1.msra.mxu0 0.0
    %89 = vmatprep.subr.mxu0 0.0
    %90 = vmatpush1.msra.mxu0 0.0
    %91 = vmatprep.subr.mxu0 0.0
    %92 = vmatpush1.msra.mxu0 0.0
    %93 = vmatprep.subr.mxu0 0.0
    %94 = vmatpush1.msra.mxu0 0.0
    %95 = vmatprep.subr.mxu0 0.0
    %96 = vmatpush1.msra.mxu0 0.0
    %97 = vmatprep.subr.mxu0 0.0
    %98 = vmatpush1.msra.mxu0 0.0
    %99 = vmatprep.subr.mxu0 0.0
    %100 = vmatpush1.msra.mxu0 0.0
    %101 = vmatprep.subr.mxu0 0.0
    %102 = vmatpush1.msra.mxu0 0.0
    %103 = vmatprep.subr.mxu0 0.0
    %104 = vmatpush1.msra.mxu0 0.0
    %105 = vmatprep.subr.mxu0 0.0
    %106 = vmatpush1.msra.mxu0 0.0
    %107 = vmatprep.subr.mxu0 0.0
    %108 = vmatpush1.msra.mxu0 0.0
    %109 = vmatprep.subr.mxu0 0.0
    %110 = vmatpush1.msra.mxu0 0.0
    %111 = vmatprep.subr.mxu0 0.0
    %112 = vmatpush1.msra.mxu0 %v79
    %113 = vmatprep.subr.mxu0 0.0
    %114 = vmatpush2.msra.mxu0 0.0
    %115 = vmatprep.subr.mxu0 0.0
    %116 = vmatpush2.msra.mxu0 0.0
    %117 = vmatprep.subr.mxu0 0.0
    %118 = vmatpush2.msra.mxu0 0.0
    %119 = vmatprep.subr.mxu0 0.0
    %120 = vmatpush2.msra.mxu0 0.0
    %121 = vmatprep.subr.mxu0 0.0
    %122 = vmatpush2.msra.mxu0 0.0
    %123 = vmatprep.subr.mxu0 0.0
    %124 = vmatpush2.msra.mxu0 0.0
    %125 = vmatprep.subr.mxu0 0.0
    %126 = vmatpush2.msra.mxu0 0.0
    %127 = vmatprep.subr.mxu0 0.0
    %128 = vmatpush2.msra.mxu0 0.0
    %129 = vmatprep.subr.mxu0 0.0
    %130 = vmatpush2.msra.mxu0 0.0
    %131 = vmatprep.subr.mxu0 0.0
    %132 = vmatpush2.msra.mxu0 0.0
    %133 = vmatprep.subr.mxu0 0.0
    %134 = vmatpush2.msra.mxu0 0.0
    %135 = vmatprep.subr.mxu0 0.0
    %136 = vmatpush2.msra.mxu0 0.0
    %137 = vmatprep.subr.mxu0 0.0
    %138 = vmatpush2.msra.mxu0 0.0
    %139 = vmatprep.subr.mxu0 0.0
    %140 = vmatpush2.msra.mxu0 0.0
    %141 = vmatprep.subr.mxu0 0.0
    %142 = vmatpush2.msra.mxu0 0.0
    %143 = vmatprep.subr.mxu0 0.0
    %144 = vmatpush2.msra.mxu0 0.0
    %145 = vmatprep.mubr.f32.mxu0 0.0
    %146 = vmatmul.mubr.f32.gmra.mxu0 %v75
    %v147 = vpop.f32.mrf.mxu0
    %v148 = vadd.f32 0.0, %v147
    %v149 = vpop.f32.mrf.mxu0
    %150 = vdwg.mxu0
    %vm151 = vcmask 80896
    %v153 = vsel %vm151, %v68, 0
    %vm155 = vcmask 1041408
    %v157 = vsel %vm155, %v70, 0
    %159 = vmatprep.subr.mxu0 0.0
    %160 = vmatpush1.msra.mxu0 0.0
    %161 = vmatprep.subr.mxu0 0.0
    %162 = vmatpush1.msra.mxu0 0.0
    %163 = vmatprep.subr.mxu0 0.0
    %164 = vmatpush1.msra.mxu0 0.0
    %165 = vmatprep.subr.mxu0 0.0
    %166 = vmatpush1.msra.mxu0 0.0
    %167 = vmatprep.subr.mxu0 0.0
    %168 = vmatpush1.msra.mxu0 0.0
    %169 = vmatprep.subr.mxu0 0.0
    %170 = vmatpush1.msra.mxu0 0.0
    %171 = vmatprep.subr.mxu0 0.0
    %172 = vmatpush1.msra.mxu0 0.0
    %173 = vmatprep.subr.mxu0 0.0
    %174 = vmatpush1.msra.mxu0 0.0
    %175 = vmatprep.subr.mxu0 0.0
    %176 = vmatpush1.msra.mxu0 0.0
    %177 = vmatprep.subr.mxu0 0.0
    %178 = vmatpush1.msra.mxu0 0.0
    %179 = vmatprep.subr.mxu0 0.0
    %180 = vmatpush1.msra.mxu0 0.0
    %181 = vmatprep.subr.mxu0 0.0
    %182 = vmatpush1.msra.mxu0 0.0
    %183 = vmatprep.subr.mxu0 0.0
    %184 = vmatpush1.msra.mxu0 0.0
    %185 = vmatprep.subr.mxu0 0.0
    %186 = vmatpush1.msra.mxu0 0.0
    %187 = vmatprep.subr.mxu0 0.0
    %188 = vmatpush1.msra.mxu0 %v157
    %189 = vmatprep.subr.mxu0 0.0
    %190 = vmatpush1.msra.mxu0 %v69
    %191 = vmatprep.subr.mxu0 0.0
    %192 = vmatpush2.msra.mxu0 0.0
    %193 = vmatprep.subr.mxu0 0.0
    %194 = vmatpush2.msra.mxu0 0.0
    %195 = vmatprep.subr.mxu0 0.0
    %196 = vmatpush2.msra.mxu0 0.0
    %197 = vmatprep.subr.mxu0 0.0
    %198 = vmatpush2.msra.mxu0 0.0
    %199 = vmatprep.subr.mxu0 0.0
    %200 = vmatpush2.msra.mxu0 0.0
    %201 = vmatprep.subr.mxu0 0.0
    %202 = vmatpush2.msra.mxu0 0.0
    %203 = vmatprep.subr.mxu0 0.0
    %204 = vmatpush2.msra.mxu0 0.0
    %205 = vmatprep.subr.mxu0 0.0
    %206 = vmatpush2.msra.mxu0 0.0
    %207 = vmatprep.subr.mxu0 0.0
    %208 = vmatpush2.msra.mxu0 0.0
    %209 = vmatprep.subr.mxu0 0.0
    %210 = vmatpush2.msra.mxu0 0.0
    %211 = vmatprep.subr.mxu0 0.0
    %212 = vmatpush2.msra.mxu0 0.0
    %213 = vmatprep.subr.mxu0 0.0
    %214 = vmatpush2.msra.mxu0 0.0
    %215 = vmatprep.subr.mxu0 0.0
    %216 = vmatpush2.msra.mxu0 0.0
    %217 = vmatprep.subr.mxu0 0.0
    %218 = vmatpush2.msra.mxu0 0.0
    %219 = vmatprep.subr.mxu0 0.0
    %220 = vmatpush2.msra.mxu0 0.0
    %221 = vmatprep.subr.mxu0 0.0
    %222 = vmatpush2.msra.mxu0 0.0
    %223 = vmatprep.mubr.f32.mxu0 0.0
    %224 = vmatmul.mubr.f32.gmra.mxu0 %v153
    %v225 = vpop.f32.mrf.mxu0
    %v226 = vadd.f32 %v148, %v225
    %v227 = vpop.f32.mrf.mxu0
    %228 = vdwg.mxu0
    %v229 = vld [vmem:[%s4] sm:$0x1]
    %v231 = vlaneseq
    %v232 = vshrl.u32 %v231, 7
    %v233 = vsub.s32 0, %v232
    %v234 = vrot.slane %v229, %v233
    %v236 = vadd.f32 %v226, %v234
    %v237 = vmax.f32 %v236, 0.0
    %v238 = vld [vmem:[%s5] sm:$0xff]
    %v239 = vld [vmem:[%s5 + $0x8] sm:$0xff]
    %v240 = vld [vmem:[%s5 + $0x10] sm:$0xff]
    %v241 = vld [vmem:[%s5 + $0x18] sm:$0xff]
    %v242 = vld [vmem:[%s6] sm:$0x1]
    %v244 = vlaneseq
    %v245 = vshrl.u32 %v244, 7
    %v246 = vsub.s32 0, %v245
    %v247 = vrot.slane %v242, %v246
    %vm249 = vcmask 261120
    %v251 = vsel %vm249, %v237, 0
    %253 = vmatprep.subr.mxu0 0.0
    %254 = vmatpush1.msra.mxu0 0.0
    %255 = vmatprep.subr.mxu0 0.0
    %256 = vmatpush1.msra.mxu0 0.0
    %257 = vmatprep.subr.mxu0 0.0
    %258 = vmatpush1.msra.mxu0 0.0
    %259 = vmatprep.subr.mxu0 0.0
    %260 = vmatpush1.msra.mxu0 0.0
    %261 = vmatprep.subr.mxu0 0.0
    %262 = vmatpush1.msra.mxu0 0.0
    %263 = vmatprep.subr.mxu0 0.0
    %264 = vmatpush1.msra.mxu0 0.0
    %265 = vmatprep.subr.mxu0 0.0
    %266 = vmatpush1.msra.mxu0 0.0
    %267 = vmatprep.subr.mxu0 0.0
    %268 = vmatpush1.msra.mxu0 0.0
    %269 = vmatprep.subr.mxu0 0.0
    %270 = vmatpush1.msra.mxu0 0.0
    %271 = vmatprep.subr.mxu0 0.0
    %272 = vmatpush1.msra.mxu0 0.0
    %273 = vmatprep.subr.mxu0 0.0
    %274 = vmatpush1.msra.mxu0 0.0
    %275 = vmatprep.subr.mxu0 0.0
    %276 = vmatpush1.msra.mxu0 0.0
    %277 = vmatprep.subr.mxu0 0.0
    %278 = vmatpush1.msra.mxu0 %v241
    %279 = vmatprep.subr.mxu0 0.0
    %280 = vmatpush1.msra.mxu0 %v240
    %281 = vmatprep.subr.mxu0 0.0
    %282 = vmatpush1.msra.mxu0 %v239
    %283 = vmatprep.subr.mxu0 0.0
    %284 = vmatpush1.msra.mxu0 %v238
    %285 = vmatprep.subr.mxu0 0.0
    %286 = vmatpush2.msra.mxu0 0.0
    %287 = vmatprep.subr.mxu0 0.0
    %288 = vmatpush2.msra.mxu0 0.0
    %289 = vmatprep.subr.mxu0 0.0
    %290 = vmatpush2.msra.mxu0 0.0
    %291 = vmatprep.subr.mxu0 0.0
    %292 = vmatpush2.msra.mxu0 0.0
    %293 = vmatprep.subr.mxu0 0.0
    %294 = vmatpush2.msra.mxu0 0.0
    %295 = vmatprep.subr.mxu0 0.0
    %296 = vmatpush2.msra.mxu0 0.0
    %297 = vmatprep.subr.mxu0 0.0
    %298 = vmatpush2.msra.mxu0 0.0
    %299 = vmatprep.subr.mxu0 0.0
    %300 = vmatpush2.msra.mxu0 0.0
    %301 = vmatprep.subr.mxu0 0.0
    %302 = vmatpush2.msra.mxu0 0.0
    %303 = vmatprep.subr.mxu0 0.0
    %304 = vmatpush2.msra.mxu0 0.0
    %305 = vmatprep.subr.mxu0 0.0
    %306 = vmatpush2.msra.mxu0 0.0
    %307 = vmatprep.subr.mxu0 0.0
    %308 = vmatpush2.msra.mxu0 0.0
    %309 = vmatprep.subr.mxu0 0.0
    %310 = vmatpush2.msra.mxu0 0.0
    %311 = vmatprep.subr.mxu0 0.0
    %312 = vmatpush2.msra.mxu0 0.0
    %313 = vmatprep.subr.mxu0 0.0
    %314 = vmatpush2.msra.mxu0 0.0
    %315 = vmatprep.subr.mxu0 0.0
    %316 = vmatpush2.msra.mxu0 0.0
    %317 = vmatprep.mubr.f32.mxu0 0.0
    %318 = vmatmul.mubr.f32.gmra.mxu0 %v251
    %v319 = vpop.f32.mrf.mxu0
    %v320 = vadd.f32 %v247, %v319
    %v321 = vpop.f32.mrf.mxu0
    %322 = vdwg.mxu0
    %v323 = vmax.f32 %v320, 0.0
    %v324 = vld [vmem:[%s7] sm:$0xff]
    %v325 = vld [vmem:[%s7 + $0x8] sm:$0xff]
    %v326 = vld [vmem:[%s7 + $0x10] sm:$0xff]
    %v327 = vld [vmem:[%s7 + $0x18] sm:$0xff]
    %v328 = vld [vmem:[%s8] sm:$0x1]
    %v330 = vlaneseq
    %v331 = vshrl.u32 %v330, 7
    %v332 = vsub.s32 0, %v331
    %v333 = vrot.slane %v328, %v332
    %v336 = vsel %vm249, %v323, 0
    %338 = vmatprep.subr.mxu0 0.0
    %339 = vmatpush1.msra.mxu0 0.0
    %340 = vmatprep.subr.mxu0 0.0
    %341 = vmatpush1.msra.mxu0 0.0
    %342 = vmatprep.subr.mxu0 0.0
    %343 = vmatpush1.msra.mxu0 0.0
    %344 = vmatprep.subr.mxu0 0.0
    %345 = vmatpush1.msra.mxu0 0.0
    %346 = vmatprep.subr.mxu0 0.0
    %347 = vmatpush1.msra.mxu0 0.0
    %348 = vmatprep.subr.mxu0 0.0
    %349 = vmatpush1.msra.mxu0 0.0
    %350 = vmatprep.subr.mxu0 0.0
    %351 = vmatpush1.msra.mxu0 0.0
    %352 = vmatprep.subr.mxu0 0.0
    %353 = vmatpush1.msra.mxu0 0.0
    %354 = vmatprep.subr.mxu0 0.0
    %355 = vmatpush1.msra.mxu0 0.0
    %356 = vmatprep.subr.mxu0 0.0
    %357 = vmatpush1.msra.mxu0 0.0
    %358 = vmatprep.subr.mxu0 0.0
    %359 = vmatpush1.msra.mxu0 0.0
    %360 = vmatprep.subr.mxu0 0.0
    %361 = vmatpush1.msra.mxu0 0.0
    %362 = vmatprep.subr.mxu0 0.0
    %363 = vmatpush1.msra.mxu0 %v327
    %364 = vmatprep.subr.mxu0 0.0
    %365 = vmatpush1.msra.mxu0 %v326
    %366 = vmatprep.subr.mxu0 0.0
    %367 = vmatpush1.msra.mxu0 %v325
    %368 = vmatprep.subr.mxu0 0.0
    %369 = vmatpush1.msra.mxu0 %v324
    %370 = vmatprep.subr.mxu0 0.0
    %371 = vmatpush2.msra.mxu0 0.0
    %372 = vmatprep.subr.mxu0 0.0
    %373 = vmatpush2.msra.mxu0 0.0
    %374 = vmatprep.subr.mxu0 0.0
    %375 = vmatpush2.msra.mxu0 0.0
    %376 = vmatprep.subr.mxu0 0.0
    %377 = vmatpush2.msra.mxu0 0.0
    %378 = vmatprep.subr.mxu0 0.0
    %379 = vmatpush2.msra.mxu0 0.0
    %380 = vmatprep.subr.mxu0 0.0
    %381 = vmatpush2.msra.mxu0 0.0
    %382 = vmatprep.subr.mxu0 0.0
    %383 = vmatpush2.msra.mxu0 0.0
    %384 = vmatprep.subr.mxu0 0.0
    %385 = vmatpush2.msra.mxu0 0.0
    %386 = vmatprep.subr.mxu0 0.0
    %387 = vmatpush2.msra.mxu0 0.0
    %388 = vmatprep.subr.mxu0 0.0
    %389 = vmatpush2.msra.mxu0 0.0
    %390 = vmatprep.subr.mxu0 0.0
    %391 = vmatpush2.msra.mxu0 0.0
    %392 = vmatprep.subr.mxu0 0.0
    %393 = vmatpush2.msra.mxu0 0.0
    %394 = vmatprep.subr.mxu0 0.0
    %395 = vmatpush2.msra.mxu0 0.0
    %396 = vmatprep.subr.mxu0 0.0
    %397 = vmatpush2.msra.mxu0 0.0
    %398 = vmatprep.subr.mxu0 0.0
    %399 = vmatpush2.msra.mxu0 0.0
    %400 = vmatprep.subr.mxu0 0.0
    %401 = vmatpush2.msra.mxu0 0.0
    %402 = vmatprep.mubr.f32.mxu0 0.0
    %403 = vmatmul.mubr.f32.gmra.mxu0 %v336
    %v404 = vpop.f32.mrf.mxu0
    %v405 = vadd.f32 %v333, %v404
    %v406 = vpop.f32.mrf.mxu0
    %407 = vdwg.mxu0
    %v408 = vtanh.pop %v405
    %v409 = vmul.f32 %v408, 2.5
    %vm410 = vcmask 64512
    %411 = vst.msk [vmem:[#allocation8] sm:$0xff] %vm410, %v409
    // Predicated region
    $region50: #{tpu_custom_call.1} parent=1 // pred_check
      _
    $region51: #{tpu_custom_call.1} parent=1 // pred_check_branch
      %413 = sbr.rel (0) target = $region53
    $region52: #{tpu_custom_call.1} parent=1 // pred_region
      %s415 = ssub.s32 128, 128
      %416 = vsyncadd [#allocation4], %s415
      %s418 = sshll.u32 [#allocation8], 4
      %s419 = int_to_ptr.vmem [resolvable:$true] %s418
      %421 = dma.vmem_to_hbm [thread:$0]  %s419, 128, %s9, [#allocation4]
    $region53: #{tpu_custom_call.1} parent=1 // pred_fallthru
      _
    // Predicated region
    $region54: #{tpu_custom_call.1} parent=1 // pred_check
      _
    $region55: #{tpu_custom_call.1} parent=1 // pred_check_branch
      %423 = sbr.rel (0) target = $region57
    $region56: #{tpu_custom_call.1} parent=1 // pred_region
      %424 = dma.done [#allocation4], 128
    $region57: #{tpu_custom_call.1} parent=1 // pred_fallthru
      _
    %425 = vsyncpa [#allocation3], 1
    %426 = vsyncpa [#allocation6], 1
    %427 = vsyncpa [#allocation4], 1

</llo_original>
